<compile_context>
chip_gen: v6e
topology: v6e:2x2x1
jax: 0.10.0
libtpu: 0.0.40
codegen_flags: <defaults>
</compile_context>

<pallas_src>
import functools

import jax
import jax.numpy as jnp
from jax.experimental import pallas as pl
from jax.experimental.pallas import tpu as pltpu


def _target_unit_logits_kernel(inv_temp,
                               en_ref,    # VMEM (Bt, 1)     int32  entity_num
                               wq_ref,    # VMEM (Bt, E)     f32    Wk @ q   per row
                               c_ref,     # VMEM (Bt, 1)     f32    q . bk   per row
                               ent_ref,   # VMEM (Bt, N, E)  bf16   entity embeddings
                               out_ref):  # VMEM (Bt, N)     f32    logits
    bt, n, _ = ent_ref.shape
    inv_t = jnp.float32(inv_temp)

    ent = ent_ref[...]                                    # (Bt, N, E) bf16
    wq = wq_ref[...]                                      # (Bt, E)    f32
    # bf16 * f32 promotes to f32: VPU multiply + lane reduce over E.
    scores = jnp.sum(ent * wq[:, None, :], axis=-1)       # (Bt, N) f32
    scores = scores + c_ref[...]                          # + q.bk (broadcast over N)

    # sequence mask + temperature, fused (masked_fill(-1e9) then div(T)).
    idx = jax.lax.broadcasted_iota(jnp.int32, (bt, n), 1)
    mask = idx < en_ref[...]                               # (Bt, N)
    neg = jnp.float32(-1.0e9) * inv_t
    out_ref[...] = jnp.where(mask, scores * inv_t, neg)


def target_unit_head_forward(embedding, entity_embedding, entity_num, params,
                             temperature=1.0, sample_key=None, batch_tile=None):
    """Returns (logits [B, N] f32, target_unit [B] int32)."""
    B, _ = embedding.shape
    _, N, E = entity_embedding.shape
    K = params["wk"].shape[1]

    # ---- hoisted query path (tiny matmuls, plain XLA) ----------------------
    h = jnp.maximum(embedding @ params["w1"] + params["b1"], 0.0)      # (B, K)
    q = (h @ params["w2"] + params["b2"]).astype(jnp.float32)          # (B, K)
    wq = (q @ params["wk"].T).astype(jnp.float32)                      # (B, E)
    c = (q @ params["bk"].T).astype(jnp.float32)                       # (B, 1)

    # ---- batch tiling (multiple of 8 sublanes, ~2 MiB of bf16 entities) ----
    row_bytes = N * E * 2
    if batch_tile is None:
        bt = max(1, (2 << 20) // row_bytes)
    else:
        bt = int(batch_tile)
    bt = max(8, -(-bt // 8) * 8)               # multiple of 8 for 2D sublane blocks
    bt = min(bt, -(-B // 8) * 8)               # never bigger than padded batch
    Bp = -(-B // bt) * bt

    ent_bf16 = entity_embedding.astype(jnp.bfloat16)
    en_i32 = entity_num.astype(jnp.int32)

    if Bp != B:
        pad = Bp - B
        ent_bf16 = jnp.pad(ent_bf16, ((0, pad), (0, 0), (0, 0)))
        wq = jnp.pad(wq, ((0, pad), (0, 0)))
        c = jnp.pad(c, ((0, pad), (0, 0)))
        en_i32 = jnp.pad(en_i32, ((0, pad),))            # padded rows fully masked
    en_col = en_i32[:, None]                             # (Bp, 1)

    kernel = functools.partial(_target_unit_logits_kernel, 1.0 / float(temperature))

    grid_spec = pltpu.PrefetchScalarGridSpec(
        num_scalar_prefetch=0,
        grid=(Bp // bt,),
        in_specs=[
            pl.BlockSpec((bt, 1), lambda t: (t, 0)),          # entity_num column
            pl.BlockSpec((bt, E), lambda t: (t, 0)),          # wq = Wk @ q
            pl.BlockSpec((bt, 1), lambda t: (t, 0)),          # c = q . bk
            pl.BlockSpec((bt, N, E), lambda t: (t, 0, 0)),    # entity embeddings
        ],
        out_specs=pl.BlockSpec((bt, N), lambda t: (t, 0)),
    )

    logits_p = pl.pallas_call(
        kernel,
        out_shape=jax.ShapeDtypeStruct((Bp, N), jnp.float32),
        grid_spec=grid_spec,
        compiler_params=pltpu.CompilerParams(
            dimension_semantics=("parallel",)),               # megacore-shardable
    )(en_col, wq, c, ent_bf16)

    logits = logits_p[:B]

    # target_unit is None path: multinomial(softmax(logits), 1) == categorical.
    # TODO(synk): sampling stays in XLA (jax.random.categorical); no in-kernel PRNG needed.
    if sample_key is None:
        sample_key = jax.random.PRNGKey(0)
    target_unit = jax.random.categorical(sample_key, logits, axis=1).astype(jnp.int32)
    return logits, target_unit


def init_params(key, input_dim, entity_embedding_dim, key_dim):
    ks = jax.random.split(key, 6)
    scale = 0.1
    return {
        "wk": scale * jax.random.normal(ks[0], (entity_embedding_dim, key_dim), jnp.float32),
        "bk": scale * jax.random.normal(ks[1], (1, key_dim), jnp.float32),
        "w1": scale * jax.random.normal(ks[2], (input_dim, key_dim), jnp.float32),
        "b1": scale * jax.random.normal(ks[3], (1, key_dim), jnp.float32),
        "w2": scale * jax.random.normal(ks[4], (key_dim, key_dim), jnp.float32),
        "b2": scale * jax.random.normal(ks[5], (1, key_dim), jnp.float32),
    }


def _reference_forward(embedding, entity_embedding, entity_num, params, temperature):
    inv_t = jnp.float32(1.0 / temperature)
    key = jnp.einsum("bne,ek->bnk", entity_embedding, params["wk"]) + params["bk"]
    h = jnp.maximum(embedding @ params["w1"] + params["b1"], 0.0)
    q = h @ params["w2"] + params["b2"]
    logits = jnp.sum(q[:, None, :] * key, axis=2)
    n = entity_embedding.shape[1]
    mask = jnp.arange(n)[None, :] < entity_num[:, None]
    return jnp.where(mask, logits * inv_t, jnp.float32(-1.0e9) * inv_t)


if __name__ == "__main__":
    # Small shapes consistent with the module config.
    B = 2            # batch
    N = 8            # max entities (seq)
    E = 32           # entity_embedding_dim
    D = 32           # input_dim (autoregressive embedding)
    K = 32           # key_dim
    TEMPERATURE = 0.8

    root = jax.random.PRNGKey(0)
    k_emb, k_ent, k_par, k_smp = jax.random.split(root, 4)

    embedding = jax.random.normal(k_emb, (B, D), jnp.float32)
    entity_embedding = jax.random.normal(k_ent, (B, N, E), jnp.float32)
    entity_num = jnp.array([5, 8], dtype=jnp.int32)

    params = init_params(k_par, D, E, K)

    logits, target_unit = target_unit_head_forward(
        embedding, entity_embedding, entity_num, params,
        temperature=TEMPERATURE, sample_key=k_smp)
    logits = jax.block_until_ready(logits)
    target_unit = jax.block_until_ready(target_unit)

    ref = _reference_forward(embedding, entity_embedding, entity_num, params, TEMPERATURE)
    assert logits.shape == (B, N) and target_unit.shape == (B,)
    # bf16 entity stream vs f32 reference: expect ~1e-2 level agreement.
    assert jnp.allclose(logits, ref, atol=5e-2, rtol=5e-2), "mismatch vs reference"
    assert bool(jnp.all(target_unit < entity_num)), "sampled unit outside valid range"
    print("KERNEL_OK")
</pallas_src>

<mosaic_0001>
module attributes {stable_mosaic.version = 11 : i64} {
  func.func @_target_unit_logits_kernel(%arg0: i32, %arg1: memref<8x1xi32, #tpu.memory_space<vmem>>, %arg2: memref<8x32xf32, #tpu.memory_space<vmem>>, %arg3: memref<8x1xf32, #tpu.memory_space<vmem>>, %arg4: memref<8x8x32xbf16, #tpu.memory_space<vmem>>, %arg5: memref<8x8xf32, #tpu.memory_space<vmem>>) attributes {dimension_semantics = [#tpu.dimension_semantics<parallel>], iteration_bounds = array<i64: 1>, scalar_prefetch = 0 : i64, scratch_operands = 0 : i64, tpu.core_type = #tpu.core_type<tc>, window_params = [{transform_indices = @transform_0, window_bounds = array<i64: 8, 1>}, {transform_indices = @transform_1, window_bounds = array<i64: 8, 32>}, {transform_indices = @transform_2, window_bounds = array<i64: 8, 1>}, {transform_indices = @transform_3, window_bounds = array<i64: 8, 8, 32>}, {transform_indices = @transform_4, window_bounds = array<i64: 8, 8>}]} {
    %c0 = arith.constant 0 : index
    %c0_0 = arith.constant 0 : index
    %c0_1 = arith.constant 0 : index
    %0 = vector.load %arg4[%c0, %c0_0, %c0_1] : memref<8x8x32xbf16, #tpu.memory_space<vmem>>, vector<8x8x32xbf16>
    %c0_2 = arith.constant 0 : index
    %c0_3 = arith.constant 0 : index
    %1 = vector.load %arg2[%c0_2, %c0_3] : memref<8x32xf32, #tpu.memory_space<vmem>>, vector<8x32xf32>
    %2 = vector.shape_cast %1 : vector<8x32xf32> to vector<8x1x32xf32>
    %3 = arith.extf %0 : vector<8x8x32xbf16> to vector<8x8x32xf32>
    %4 = vector.broadcast %2 : vector<8x1x32xf32> to vector<8x8x32xf32>
    %5 = arith.mulf %3, %4 : vector<8x8x32xf32>
    %cst = arith.constant dense<0.000000e+00> : vector<8x8xf32>
    %6 = vector.multi_reduction <add>, %5, %cst [2] : vector<8x8x32xf32> to vector<8x8xf32>
    %c0_4 = arith.constant 0 : index
    %c0_5 = arith.constant 0 : index
    %7 = vector.load %arg3[%c0_4, %c0_5] : memref<8x1xf32, #tpu.memory_space<vmem>>, vector<8x1xf32>
    %8 = vector.broadcast %7 : vector<8x1xf32> to vector<8x8xf32>
    %9 = arith.addf %6, %8 : vector<8x8xf32>
    %10 = tpu.iota {dimensions = array<i32: 1>} : vector<8x8xi32>
    %c0_6 = arith.constant 0 : index
    %c0_7 = arith.constant 0 : index
    %11 = vector.load %arg1[%c0_6, %c0_7] : memref<8x1xi32, #tpu.memory_space<vmem>>, vector<8x1xi32>
    %12 = vector.broadcast %11 : vector<8x1xi32> to vector<8x8xi32>
    %13 = arith.cmpi slt, %10, %12 : vector<8x8xi32>
    %cst_8 = arith.constant -1.000000e+09 : f32
    %cst_9 = arith.constant 1.250000e+00 : f32
    %14 = arith.mulf %cst_8, %cst_9 : f32
    %cst_10 = arith.constant 1.250000e+00 : f32
    %15 = vector.broadcast %cst_10 : f32 to vector<8x8xf32>
    %16 = arith.mulf %9, %15 : vector<8x8xf32>
    %17 = vector.broadcast %14 : f32 to vector<8x8xf32>
    %18 = arith.select %13, %16, %17 : vector<8x8xi1>, vector<8x8xf32>
    %c0_11 = arith.constant 0 : index
    %c0_12 = arith.constant 0 : index
    %19 = vector.load %arg5[%c0_11, %c0_12] : memref<8x8xf32, #tpu.memory_space<vmem>>, vector<8x8xf32>
    tpu.vector_store %arg5[%c0_11, %c0_12], %18 {strides = array<i32>} : memref<8x8xf32, #tpu.memory_space<vmem>>, vector<8x8xf32>,
    return
  }
  func.func @transform_0(%arg0: i32) -> (i32, i32) {
    %c0_i32 = arith.constant 0 : i32
    %c0_i32_0 = arith.constant 0 : i32
    return %arg0, %c0_i32 : i32, i32
  }
  func.func @transform_1(%arg0: i32) -> (i32, i32) {
    %c0_i32 = arith.constant 0 : i32
    %c0_i32_0 = arith.constant 0 : i32
    return %arg0, %c0_i32 : i32, i32
  }
  func.func @transform_2(%arg0: i32) -> (i32, i32) {
    %c0_i32 = arith.constant 0 : i32
    %c0_i32_0 = arith.constant 0 : i32
    return %arg0, %c0_i32 : i32, i32
  }
  func.func @transform_3(%arg0: i32) -> (i32, i32, i32) {
    %c0_i32 = arith.constant 0 : i32
    %c0_i32_0 = arith.constant 0 : i32
    %c0_i32_1 = arith.constant 0 : i32
    return %arg0, %c0_i32, %c0_i32_0 : i32, i32, i32
  }
  func.func @transform_4(%arg0: i32) -> (i32, i32) {
    %c0_i32 = arith.constant 0 : i32
    %c0_i32_0 = arith.constant 0 : i32
    return %arg0, %c0_i32 : i32, i32
  }
}

</mosaic_0001>

<llo_original>
// kernel: tpu_custom_call.1
$region0: #{tpu_custom_call.1}
  #allocation0 [shape = 'u32[]', space=smem, size = 0x4, offset = 0x4, fixed_abs, tag = 'smem constant byte address 0x4 - core index']
  #allocation1 [shape = 'u32[144,128]{1,0:T(1,128)}', space=vmem, size = 0x12000, scoped, tag = 'internal scratch']
  %s0 = inlined_call_operand.vmem [shape: s32[8,1], index: 0, kind: input, shape index: {}]
  %s1 = inlined_call_operand.vmem [shape: f32[8,32], index: 1, kind: input, shape index: {}]
  %s2 = inlined_call_operand.vmem [shape: f32[8,1], index: 2, kind: input, shape index: {}]
  %s3 = inlined_call_operand.hbm [shape: bf16[8,8,32], index: 3, kind: input, shape index: {}]
  %s4 = inlined_call_operand.hbm [shape: f32[8,8], index: 4, kind: output, shape index: {}]
  %s5 = sld [smem:[#allocation0]]
  $region30: #{tpu_custom_call.1} parent=0
    _
  %s7 = ssub.s32 1, %s5
  %s8 = scalar_select 0, %s7, %s5
  $region1: #{tpu_custom_call.1} parent=0
    #allocation2 [shape = 'u8[16384]{0}', space=vmem, size = 0x4000, scoped, tag = 'input window, operand 3, single buffered']
    #allocation3 [shape = 's32[1]{0}', space=sflag, size = 0x4, scoped, tag = 'scoped memory for tpu_custom_call.1']
    #allocation4 [shape = 's32[1]{0}', space=sflag, size = 0x4, scoped, tag = 'scoped memory for tpu_custom_call.1']
    #allocation5 [shape = 'u8[4096]{0}', space=vmem, size = 0x1000, scoped, tag = 'output window, operand 0, single buffered']
    %9 = vsyncpa [#allocation3], 0
    %10 = vsyncpa [#allocation4], 0
    // Predicated region
    $region2: #{tpu_custom_call.1} parent=1 // pred_check
      _
    $region3: #{tpu_custom_call.1} parent=1 // pred_check_branch
      %12 = sbr.rel (0) target = $region5
    $region4: #{tpu_custom_call.1} parent=1 // pred_region
      _
    $region5: #{tpu_custom_call.1} parent=1 // pred_fallthru
      _
    // Predicated region
    $region6: #{tpu_custom_call.1} parent=1 // pred_check
      _
    $region7: #{tpu_custom_call.1} parent=1 // pred_check_branch
      %14 = sbr.rel (0) target = $region9
    $region8: #{tpu_custom_call.1} parent=1 // pred_region
      _
    $region9: #{tpu_custom_call.1} parent=1 // pred_fallthru
      _
    // Predicated region
    $region10: #{tpu_custom_call.1} parent=1 // pred_check
      _
    $region11: #{tpu_custom_call.1} parent=1 // pred_check_branch
      %16 = sbr.rel (0) target = $region13
    $region12: #{tpu_custom_call.1} parent=1 // pred_region
      _
    $region13: #{tpu_custom_call.1} parent=1 // pred_fallthru
      _
    // Predicated region
    $region14: #{tpu_custom_call.1} parent=1 // pred_check
      _
    $region15: #{tpu_custom_call.1} parent=1 // pred_check_branch
      %18 = sbr.rel (0) target = $region17
    $region16: #{tpu_custom_call.1} parent=1 // pred_region
      %s20 = ssub.s32 512, 512
      %21 = vsyncadd [#allocation3], %s20
      %s22 = sshll.u32 [#allocation2], 4
      %s23 = int_to_ptr.vmem [resolvable:$true] %s22
      %28 = dma.hbm_to_vmem [thread:$0]  %s3, 512, %s23, [#allocation3], 64, 64, 4
    $region17: #{tpu_custom_call.1} parent=1 // pred_fallthru
      _
    // Predicated region
    $region18: #{tpu_custom_call.1} parent=1 // pred_check
      _
    $region19: #{tpu_custom_call.1} parent=1 // pred_check_branch
      %30 = sbr.rel (0) target = $region21
    $region20: #{tpu_custom_call.1} parent=1 // pred_region
      %31 = dma.done [#allocation3], 512
    $region21: #{tpu_custom_call.1} parent=1 // pred_fallthru
      _
    %v32 = vld [vmem:[#allocation2] sm:$0xf]
    %v33 = vld [vmem:[#allocation2 + $0x4] sm:$0xf]
    %v34 = vld [vmem:[#allocation2 + $0x8] sm:$0xf]
    %v35 = vld [vmem:[#allocation2 + $0xc] sm:$0xf]
    %v36 = vld [vmem:[#allocation2 + $0x10] sm:$0xf]
    %v37 = vld [vmem:[#allocation2 + $0x14] sm:$0xf]
    %v38 = vld [vmem:[#allocation2 + $0x18] sm:$0xf]
    %v39 = vld [vmem:[#allocation2 + $0x1c] sm:$0xf]
    %v40 = vld [vmem:[%s1] sm:$0xff]
    %v42 = vcombine.high %v40, %v40
    %v44 = vunpack.c.l.s4 1966171168
    %v45 = vunpack.c.0.s8 %v44
    %v46 = vlaneseq
    %v47 = vshrl.u32 %v46, 7
    %v48 = vsub.s32 %v45, %v47
    %v49 = vrot.slane %v40, %v48
    %v51 = vunpack.c.l.s4 1966171168
    %v52 = vunpack.c.0.s8 %v51
    %v53 = vlaneseq
    %v54 = vshrl.u32 %v53, 7
    %v55 = vsub.s32 %v52, %v54
    %v56 = vrot.slane %v42, %v55
    %v57 = vcombine.high %v49, %v49
    %v58 = vcombine.high %v56, %v56
    %v60 = vunpack.c.l.s4 1966171168
    %v61 = vunpack.c.0.s8 %v60
    %v62 = vlaneseq
    %v63 = vshrl.u32 %v62, 7
    %v64 = vsub.s32 %v61, %v63
    %v65 = vrot.slane %v49, %v64
    %v67 = vunpack.c.l.s4 1966171168
    %v68 = vunpack.c.0.s8 %v67
    %v69 = vlaneseq
    %v70 = vshrl.u32 %v69, 7
    %v71 = vsub.s32 %v68, %v70
    %v72 = vrot.slane %v56, %v71
    %v74 = vunpack.c.l.s4 1966171168
    %v75 = vunpack.c.0.s8 %v74
    %v76 = vlaneseq
    %v77 = vshrl.u32 %v76, 7
    %v78 = vsub.s32 %v75, %v77
    %v79 = vrot.slane %v57, %v78
    %v81 = vunpack.c.l.s4 1966171168
    %v82 = vunpack.c.0.s8 %v81
    %v83 = vlaneseq
    %v84 = vshrl.u32 %v83, 7
    %v85 = vsub.s32 %v82, %v84
    %v86 = vrot.slane %v58, %v85
    %v87 = vcombine.high %v65, %v65
    %v88 = vcombine.high %v72, %v72
    %v89 = vcombine.high %v79, %v79
    %v90 = vcombine.high %v86, %v86
    %v91 = vunpack.c.l.bf16 %v32
    %v92 = vunpack.c.l.bf16 %v33
    %v93 = vunpack.c.l.bf16 %v34
    %v94 = vunpack.c.l.bf16 %v35
    %v95 = vunpack.c.l.bf16 %v36
    %v96 = vunpack.c.l.bf16 %v37
    %v97 = vunpack.c.l.bf16 %v38
    %v98 = vunpack.c.l.bf16 %v39
    %v99 = vlaneseq
    %v100 = vshrl.u32 %v99, 7
    %v101 = vsub.s32 0, %v100
    %v102 = vrot.slane %v65, %v101
    %v103 = vlaneseq
    %v104 = vshrl.u32 %v103, 7
    %v105 = vsub.s32 0, %v104
    %v106 = vrot.slane %v79, %v105
    %v107 = vlaneseq
    %v108 = vshrl.u32 %v107, 7
    %v109 = vsub.s32 0, %v108
    %v110 = vrot.slane %v87, %v109
    %v111 = vlaneseq
    %v112 = vshrl.u32 %v111, 7
    %v113 = vsub.s32 0, %v112
    %v114 = vrot.slane %v89, %v113
    %v115 = vlaneseq
    %v116 = vshrl.u32 %v115, 7
    %v117 = vsub.s32 0, %v116
    %v118 = vrot.slane %v72, %v117
    %v119 = vlaneseq
    %v120 = vshrl.u32 %v119, 7
    %v121 = vsub.s32 0, %v120
    %v122 = vrot.slane %v86, %v121
    %v123 = vlaneseq
    %v124 = vshrl.u32 %v123, 7
    %v125 = vsub.s32 0, %v124
    %v126 = vrot.slane %v88, %v125
    %v127 = vlaneseq
    %v128 = vshrl.u32 %v127, 7
    %v129 = vsub.s32 0, %v128
    %v130 = vrot.slane %v90, %v129
    %v139 = vmul.f32 %v91, %v102
    %v140 = vmul.f32 %v92, %v106
    %v141 = vmul.f32 %v93, %v110
    %v142 = vmul.f32 %v94, %v114
    %v143 = vmul.f32 %v95, %v118
    %v144 = vmul.f32 %v96, %v122
    %v145 = vmul.f32 %v97, %v126
    %v146 = vmul.f32 %v98, %v130
    %vm147 = vcmask 261120
    %v148 = vsel %vm147, %v139, 0.0
    %149 = vadd.xlane.f32.xlu0 %v148
    %v150 = vpop.xlane.xlu0 %149
    %v151 = vsel %vm147, %v140, 0.0
    %152 = vadd.xlane.f32.xlu0 %v151
    %v153 = vpop.xlane.xlu0 %152
    %v154 = vsel %vm147, %v141, 0.0
    %155 = vadd.xlane.f32.xlu0 %v154
    %v156 = vpop.xlane.xlu0 %155
    %v157 = vsel %vm147, %v142, 0.0
    %158 = vadd.xlane.f32.xlu0 %v157
    %v159 = vpop.xlane.xlu0 %158
    %v160 = vsel %vm147, %v143, 0.0
    %161 = vadd.xlane.f32.xlu0 %v160
    %v162 = vpop.xlane.xlu0 %161
    %v163 = vsel %vm147, %v144, 0.0
    %164 = vadd.xlane.f32.xlu0 %v163
    %v165 = vpop.xlane.xlu0 %164
    %v166 = vsel %vm147, %v145, 0.0
    %167 = vadd.xlane.f32.xlu0 %v166
    %v168 = vpop.xlane.xlu0 %167
    %v169 = vsel %vm147, %v146, 0.0
    %170 = vadd.xlane.f32.xlu0 %v169
    %v171 = vpop.xlane.xlu0 %170
    %v172 = vld [vmem:[%s2] sm:$0xff]
    %174 = vset.pattern.permute.xlu0 0
    %175 = vperm.xlu0 %174, %v172
    %v176 = vpop.permute.xlu0 %175
    %v177 = vlaneseq
    %v178 = vshrl.u32 %v177, 7
    %v179 = vsub.s32 0, %v178
    %v180 = vrot.slane %v176, %v179
    %v181 = vlaneseq
    %v182 = vshrl.u32 %v181, 7
    %v183 = vsub.s32 1, %v182
    %v184 = vrot.slane %v176, %v183
    %v185 = vlaneseq
    %v186 = vshrl.u32 %v185, 7
    %v187 = vsub.s32 2, %v186
    %v188 = vrot.slane %v176, %v187
    %v189 = vlaneseq
    %v190 = vshrl.u32 %v189, 7
    %v191 = vsub.s32 3, %v190
    %v192 = vrot.slane %v176, %v191
    %v193 = vlaneseq
    %v194 = vshrl.u32 %v193, 7
    %v195 = vsub.s32 4, %v194
    %v196 = vrot.slane %v176, %v195
    %v197 = vlaneseq
    %v198 = vshrl.u32 %v197, 7
    %v199 = vsub.s32 5, %v198
    %v200 = vrot.slane %v176, %v199
    %v201 = vlaneseq
    %v202 = vshrl.u32 %v201, 7
    %v203 = vsub.s32 6, %v202
    %v204 = vrot.slane %v176, %v203
    %v205 = vlaneseq
    %v206 = vshrl.u32 %v205, 7
    %v207 = vsub.s32 7, %v206
    %v208 = vrot.slane %v176, %v207
    %v217 = vadd.f32 %v150, %v180
    %v218 = vadd.f32 %v153, %v184
    %v219 = vadd.f32 %v156, %v188
    %v220 = vadd.f32 %v159, %v192
    %v221 = vadd.f32 %v162, %v196
    %v222 = vadd.f32 %v165, %v200
    %v223 = vadd.f32 %v168, %v204
    %v224 = vadd.f32 %v171, %v208
    %v225 = vlaneseq
    %v226 = vand.u32 %v225, 127
    %v227 = vld [vmem:[%s0] sm:$0xff]
    %228 = vset.pattern.permute.xlu0 0
    %229 = vperm.xlu0 %228, %v227
    %v230 = vpop.permute.xlu0 %229
    %vm231 = vcmp.lt.s32.totalorder %v226, %v230
    %v232 = vmul.f32 %v217, 1.25
    %v233 = vmul.f32 %v218, 1.25
    %v234 = vmul.f32 %v219, 1.25
    %v235 = vmul.f32 %v220, 1.25
    %v236 = vmul.f32 %v221, 1.25
    %v237 = vmul.f32 %v222, 1.25
    %v238 = vmul.f32 %v223, 1.25
    %v239 = vmul.f32 %v224, 1.25
    %248 = vset.pattern.permute.xlu0 0
    %249 = vperm.xlu0 %248, %v232
    %v250 = vpop.permute.xlu0 %249
    %251 = vset.pattern.permute.xlu0 0
    %252 = vperm.xlu0 %251, %v233
    %v253 = vpop.permute.xlu0 %252
    %254 = vset.pattern.permute.xlu0 0
    %255 = vperm.xlu0 %254, %v234
    %v256 = vpop.permute.xlu0 %255
    %257 = vset.pattern.permute.xlu0 0
    %258 = vperm.xlu0 %257, %v235
    %v259 = vpop.permute.xlu0 %258
    %260 = vset.pattern.permute.xlu0 0
    %261 = vperm.xlu0 %260, %v236
    %v262 = vpop.permute.xlu0 %261
    %263 = vset.pattern.permute.xlu0 0
    %264 = vperm.xlu0 %263, %v237
    %v265 = vpop.permute.xlu0 %264
    %266 = vset.pattern.permute.xlu0 0
    %267 = vperm.xlu0 %266, %v238
    %v268 = vpop.permute.xlu0 %267
    %269 = vset.pattern.permute.xlu0 0
    %270 = vperm.xlu0 %269, %v239
    %v271 = vpop.permute.xlu0 %270
    %v272 = vlaneseq
    %v273 = vshrl.u32 %v272, 7
    %v274 = vsub.s32 %v226, %v273
    %v275 = vrot.slane %v250, %v274
    %v276 = vlaneseq
    %v277 = vshrl.u32 %v276, 7
    %v278 = vsub.s32 %v226, %v277
    %v279 = vrot.slane %v253, %v278
    %v280 = vlaneseq
    %v281 = vshrl.u32 %v280, 7
    %v282 = vsub.s32 %v226, %v281
    %v283 = vrot.slane %v256, %v282
    %v284 = vlaneseq
    %v285 = vshrl.u32 %v284, 7
    %v286 = vsub.s32 %v226, %v285
    %v287 = vrot.slane %v259, %v286
    %v288 = vlaneseq
    %v289 = vshrl.u32 %v288, 7
    %v290 = vsub.s32 %v226, %v289
    %v291 = vrot.slane %v262, %v290
    %v292 = vlaneseq
    %v293 = vshrl.u32 %v292, 7
    %v294 = vsub.s32 %v226, %v293
    %v295 = vrot.slane %v265, %v294
    %v296 = vlaneseq
    %v297 = vshrl.u32 %v296, 7
    %v298 = vsub.s32 %v226, %v297
    %v299 = vrot.slane %v268, %v298
    %v300 = vlaneseq
    %v301 = vshrl.u32 %v300, 7
    %v302 = vsub.s32 %v226, %v301
    %v303 = vrot.slane %v271, %v302
    %vm304 = vcmask 1041409
    %v305 = vsel %vm304, %v279, %v275
    %vm306 = vcmask 1042434
    %v307 = vsel %vm306, %v283, %v305
    %vm308 = vcmask 1043459
    %v309 = vsel %vm308, %v287, %v307
    %vm310 = vcmask 1044484
    %v311 = vsel %vm310, %v291, %v309
    %vm312 = vcmask 1045509
    %v313 = vsel %vm312, %v295, %v311
    %vm314 = vcmask 1046534
    %v315 = vsel %vm314, %v299, %v313
    %vm316 = vcmask 1047559
    %v317 = vsel %vm316, %v303, %v315
    %v319 = vsel %vm231, %v317, -1.25e+09
    %vm320 = vcmask 64512
    %321 = vst.msk [vmem:[#allocation5] sm:$0xff] %vm320, %v319
    // Predicated region
    $region22: #{tpu_custom_call.1} parent=1 // pred_check
      _
    $region23: #{tpu_custom_call.1} parent=1 // pred_check_branch
      %323 = sbr.rel (0) target = $region25
    $region24: #{tpu_custom_call.1} parent=1 // pred_region
      %s325 = ssub.s32 128, 128
      %326 = vsyncadd [#allocation4], %s325
      %s328 = sshll.u32 [#allocation5], 4
      %s329 = int_to_ptr.vmem [resolvable:$true] %s328
      %331 = dma.vmem_to_hbm [thread:$0]  %s329, 128, %s4, [#allocation4]
    $region25: #{tpu_custom_call.1} parent=1 // pred_fallthru
      _
    // Predicated region
    $region26: #{tpu_custom_call.1} parent=1 // pred_check
      _
    $region27: #{tpu_custom_call.1} parent=1 // pred_check_branch
      %333 = sbr.rel (0) target = $region29
    $region28: #{tpu_custom_call.1} parent=1 // pred_region
      %334 = dma.done [#allocation4], 128
    $region29: #{tpu_custom_call.1} parent=1 // pred_fallthru
      _
    %335 = vsyncpa [#allocation3], 1
    %336 = vsyncpa [#allocation4], 1

</llo_original>
